<compile_context>
chip_gen: v5e
topology: v5e:2x2
jax: 0.10.0
libtpu: 0.0.40
codegen_flags: <defaults>
</compile_context>

<pallas_src>
import math
import numpy as np
import jax
import jax.numpy as jnp
from jax.experimental import pallas as pl
from jax.experimental.pallas import tpu as pltpu  # noqa: F401  (TPU backend)

# ----------------------- model hyper-parameters -----------------------------
B = 2            # batch
S = 8            # sequence length
E = 32           # embed_dim
NUM_HEADS = 4
HEAD_DIM = E // NUM_HEADS
MLP_RATIO = 4.0
H = int(E * MLP_RATIO)      # mlp hidden dim = 128
EPS = 1e-5                  # nn.LayerNorm default eps
_SCALE = 1.0 / math.sqrt(HEAD_DIM)
_INV_SQRT2 = 1.0 / math.sqrt(2.0)


def _gelu_exact(x):
    # nn.GELU() default = exact (erf-based) GELU
    return 0.5 * x * (1.0 + jax.lax.erf(x * _INV_SQRT2))


# ------------------------------ kernel --------------------------------------
def encoder_block_kernel(
    x_ref,                       # (B, S, E)       f32
    ln1_w_ref, ln1_b_ref,        # (1, E), (1, E)  f32
    wqkv_ref, bqkv_ref,          # (E, 3E) bf16, (1, 3E) f32
    wo_ref, bo_ref,              # (NH, HD, E) bf16, (1, E) f32
    ln2_w_ref, ln2_b_ref,        # (1, E), (1, E)  f32
    w1_ref, b1_ref,              # (E, H) bf16, (1, H) f32
    w2_ref, b2_ref,              # (H, E) bf16, (1, E) f32
    o_ref,                       # (B, S, E)       f32
):
    # Flatten batch+seq (leading-dim merge only; layout-preserving).
    xf = x_ref[...].reshape(B * S, E)                 # [16, 32] f32

    # ---------------- LayerNorm 1 (f32) ----------------
    mu = jnp.mean(xf, axis=-1, keepdims=True)
    var = jnp.mean((xf - mu) ** 2, axis=-1, keepdims=True)
    xn = (xf - mu) * jax.lax.rsqrt(var + EPS)
    xn = xn * ln1_w_ref[...] + ln1_b_ref[...]

    # ---------------- fused QKV projection (bf16 MXU, f32 accum) ------------
    qkv = jnp.dot(xn.astype(jnp.bfloat16), wqkv_ref[...],
                  preferred_element_type=jnp.float32) + bqkv_ref[...]  # [16, 96]
    q = (qkv[:, 0 * E:1 * E] * _SCALE).reshape(B, S, E)   # [2, 8, 32]
    k = qkv[:, 1 * E:2 * E].reshape(B, S, E)
    v = qkv[:, 2 * E:3 * E].reshape(B, S, E)

    # ---------------- multi-head self-attention ----------------
    # Heads unrolled (static loop of 4); each head is batched over B with a
    # single-batch-dim einsum, and its output is folded straight into the
    # output projection (accumulated) so no lane-axis concatenate is needed.
    proj = None
    for h in range(NUM_HEADS):
        lo, hi = h * HEAD_DIM, (h + 1) * HEAD_DIM
        qh = q[:, :, lo:hi]                           # [B, S, HD]
        kh = k[:, :, lo:hi]
        vh = v[:, :, lo:hi]

        s = jnp.einsum("bqd,bkd->bqk", qh, kh,
                       preferred_element_type=jnp.float32)     # [B, S, S]
        s = s - jnp.max(s, axis=-1, keepdims=True)
        p = jnp.exp(s)
        denom = jnp.sum(p, axis=-1, keepdims=True)
        p = p * pl.reciprocal(denom, approx=True)               # EUP, not VPU div

        ctx = jnp.einsum("bqk,bkd->bqd", p, vh,
                         preferred_element_type=jnp.float32)    # [B, S, HD]
        ctx2 = ctx.reshape(B * S, HEAD_DIM)                     # leading-dim merge
        part = jnp.dot(ctx2.astype(jnp.bfloat16), wo_ref[h],
                       preferred_element_type=jnp.float32)      # [16, E]
        proj = part if proj is None else proj + part

    # dropout = identity (inference); residual with ORIGINAL x
    x1 = proj + bo_ref[...] + xf                      # [16, 32]

    # ---------------- LayerNorm 2 (f32) ----------------
    mu2 = jnp.mean(x1, axis=-1, keepdims=True)
    var2 = jnp.mean((x1 - mu2) ** 2, axis=-1, keepdims=True)
    x1n = (x1 - mu2) * jax.lax.rsqrt(var2 + EPS)
    x1n = x1n * ln2_w_ref[...] + ln2_b_ref[...]

    # ---------------- MLP (bf16 MXU, f32 accum; GELU in f32) ----------------
    hmid = jnp.dot(x1n.astype(jnp.bfloat16), w1_ref[...],
                   preferred_element_type=jnp.float32) + b1_ref[...]   # [16, H]
    hmid = _gelu_exact(hmid)
    out = jnp.dot(hmid.astype(jnp.bfloat16), w2_ref[...],
                  preferred_element_type=jnp.float32) + b2_ref[...]    # [16, E]

    o_ref[...] = (out + x1).reshape(B, S, E)          # leading-dim split (safe)


# ------------------------------ wrapper --------------------------------------
def transformer_encoder_block(x, params):
    """x: [B, S, E] float32. params: dict of float32 weights (PyTorch layout)."""
    Bsz, Ss, Es = x.shape
    assert (Bsz, Ss, Es) == (B, S, E)

    # Weights for the MXU are stored bf16 (halves DMA bytes); biases and LN
    # params stay f32 and are passed as (1, N) 2-D arrays for clean lane layout.
    args = (
        x,
        params["ln1_w"].reshape(1, E).astype(jnp.float32),
        params["ln1_b"].reshape(1, E).astype(jnp.float32),
        params["wqkv"].astype(jnp.bfloat16),
        params["bqkv"].reshape(1, 3 * E).astype(jnp.float32),
        params["wo"].reshape(NUM_HEADS, HEAD_DIM, E).astype(jnp.bfloat16),
        params["bo"].reshape(1, E).astype(jnp.float32),
        params["ln2_w"].reshape(1, E).astype(jnp.float32),
        params["ln2_b"].reshape(1, E).astype(jnp.float32),
        params["w1"].astype(jnp.bfloat16),
        params["b1"].reshape(1, H).astype(jnp.float32),
        params["w2"].astype(jnp.bfloat16),
        params["b2"].reshape(1, E).astype(jnp.float32),
    )

    # No grid: one invocation, full arrays resident in VMEM (default specs),
    # no per-batch pipeline overhead and no double-buffering of weights.
    return pl.pallas_call(
        encoder_block_kernel,
        out_shape=jax.ShapeDtypeStruct((B, S, E), jnp.float32),
    )(*args)


# --------------------------- pure-JAX reference ------------------------------
def reference_block(x, p):
    def ln(z, w, b):
        mu = jnp.mean(z, axis=-1, keepdims=True)
        var = jnp.mean((z - mu) ** 2, axis=-1, keepdims=True)
        return (z - mu) * jax.lax.rsqrt(var + EPS) * w + b

    res = x
    xn = ln(x, p["ln1_w"], p["ln1_b"])
    qkv = xn @ p["wqkv"] + p["bqkv"]
    q, k, v = qkv[..., :E], qkv[..., E:2 * E], qkv[..., 2 * E:]

    def split_heads(t):  # [B,S,E] -> [B,nh,S,hd]
        return t.reshape(B, S, NUM_HEADS, HEAD_DIM).transpose(0, 2, 1, 3)

    qh, kh, vh = split_heads(q), split_heads(k), split_heads(v)
    scores = jnp.einsum("bhqd,bhkd->bhqk", qh, kh) / math.sqrt(HEAD_DIM)
    probs = jax.nn.softmax(scores, axis=-1)
    attn = jnp.einsum("bhqk,bhkd->bhqd", probs, vh)
    attn = attn.transpose(0, 2, 1, 3).reshape(B, S, E)
    attn = attn @ p["wo"] + p["bo"]
    x1 = attn + res

    x1n = ln(x1, p["ln2_w"], p["ln2_b"])
    hmid = _gelu_exact(x1n @ p["w1"] + p["b1"])
    out = hmid @ p["w2"] + p["b2"]
    return out + x1


# ------------------------------ main -----------------------------------------
if __name__ == "__main__":
    key = jax.random.PRNGKey(0)
    ks = jax.random.split(key, 16)

    def init(k, shape, scale=0.05):
        return (scale * jax.random.normal(k, shape)).astype(jnp.float32)

    params = {
        "ln1_w": jnp.ones((E,), jnp.float32),
        "ln1_b": jnp.zeros((E,), jnp.float32),
        "wqkv": init(ks[0], (E, 3 * E)),
        "bqkv": init(ks[1], (3 * E,)),
        "wo": init(ks[2], (E, E)),
        "bo": init(ks[3], (E,)),
        "ln2_w": jnp.ones((E,), jnp.float32),
        "ln2_b": jnp.zeros((E,), jnp.float32),
        "w1": init(ks[4], (E, H)),
        "b1": init(ks[5], (H,)),
        "w2": init(ks[6], (H, E)),
        "b2": init(ks[7], (E,)),
    }

    x = jax.random.normal(ks[8], (B, S, E), dtype=jnp.float32)

    out = transformer_encoder_block(x, params)
    out = jax.block_until_ready(out)

    ref = jax.block_until_ready(reference_block(x, params))
    assert out.shape == (B, S, E)
    # bf16 MXU operands + approx reciprocal => slightly looser tolerance vs f32 reference
    assert np.allclose(np.asarray(out), np.asarray(ref), rtol=2e-2, atol=2e-2)

    print("KERNEL_OK")
</pallas_src>

<mosaic_0001>
module attributes {stable_mosaic.version = 11 : i64} {
  func.func @encoder_block_kernel(%arg0: memref<2x8x32xf32, #tpu.memory_space<vmem>>, %arg1: memref<1x32xf32, #tpu.memory_space<vmem>>, %arg2: memref<1x32xf32, #tpu.memory_space<vmem>>, %arg3: memref<32x96xbf16, #tpu.memory_space<vmem>>, %arg4: memref<1x96xf32, #tpu.memory_space<vmem>>, %arg5: memref<4x8x32xbf16, #tpu.memory_space<vmem>>, %arg6: memref<1x32xf32, #tpu.memory_space<vmem>>, %arg7: memref<1x32xf32, #tpu.memory_space<vmem>>, %arg8: memref<1x32xf32, #tpu.memory_space<vmem>>, %arg9: memref<32x128xbf16, #tpu.memory_space<vmem>>, %arg10: memref<1x128xf32, #tpu.memory_space<vmem>>, %arg11: memref<128x32xbf16, #tpu.memory_space<vmem>>, %arg12: memref<1x32xf32, #tpu.memory_space<vmem>>, %arg13: memref<2x8x32xf32, #tpu.memory_space<vmem>>) attributes {dimension_semantics = [], scalar_prefetch = 0 : i64, scratch_operands = 0 : i64, tpu.core_type = #tpu.core_type<tc>} {
    %c0 = arith.constant 0 : index
    %c0_0 = arith.constant 0 : index
    %c0_1 = arith.constant 0 : index
    %0 = vector.load %arg0[%c0, %c0_0, %c0_1] : memref<2x8x32xf32, #tpu.memory_space<vmem>>, vector<2x8x32xf32>
    %1 = vector.shape_cast %0 : vector<2x8x32xf32> to vector<16x32xf32>
    %cst = arith.constant dense<0.000000e+00> : vector<16xf32>
    %2 = vector.multi_reduction <add>, %1, %cst [1] : vector<16x32xf32> to vector<16xf32>
    %3 = vector.shape_cast %2 : vector<16xf32> to vector<16x1xf32>
    %cst_2 = arith.constant 3.200000e+01 : f32
    %4 = vector.broadcast %cst_2 : f32 to vector<16x1xf32>
    %5 = arith.divf %3, %4 : vector<16x1xf32>
    %6 = vector.broadcast %5 : vector<16x1xf32> to vector<16x32xf32>
    %7 = arith.subf %1, %6 : vector<16x32xf32>
    %8 = arith.mulf %7, %7 : vector<16x32xf32>
    %cst_3 = arith.constant dense<0.000000e+00> : vector<16xf32>
    %9 = vector.multi_reduction <add>, %8, %cst_3 [1] : vector<16x32xf32> to vector<16xf32>
    %10 = vector.shape_cast %9 : vector<16xf32> to vector<16x1xf32>
    %cst_4 = arith.constant 3.200000e+01 : f32
    %11 = vector.broadcast %cst_4 : f32 to vector<16x1xf32>
    %12 = arith.divf %10, %11 : vector<16x1xf32>
    %13 = vector.broadcast %5 : vector<16x1xf32> to vector<16x32xf32>
    %14 = arith.subf %1, %13 : vector<16x32xf32>
    %cst_5 = arith.constant 9.99999974E-6 : f32
    %15 = vector.broadcast %cst_5 : f32 to vector<16x1xf32>
    %16 = arith.addf %12, %15 : vector<16x1xf32>
    %17 = math.rsqrt %16 : vector<16x1xf32>
    %18 = vector.broadcast %17 : vector<16x1xf32> to vector<16x32xf32>
    %19 = arith.mulf %14, %18 : vector<16x32xf32>
    %c0_6 = arith.constant 0 : index
    %c0_7 = arith.constant 0 : index
    %20 = vector.load %arg1[%c0_6, %c0_7] : memref<1x32xf32, #tpu.memory_space<vmem>>, vector<1x32xf32>
    %21 = vector.broadcast %20 : vector<1x32xf32> to vector<16x32xf32>
    %22 = arith.mulf %19, %21 : vector<16x32xf32>
    %c0_8 = arith.constant 0 : index
    %c0_9 = arith.constant 0 : index
    %23 = vector.load %arg2[%c0_8, %c0_9] : memref<1x32xf32, #tpu.memory_space<vmem>>, vector<1x32xf32>
    %24 = vector.broadcast %23 : vector<1x32xf32> to vector<16x32xf32>
    %25 = arith.addf %22, %24 : vector<16x32xf32>
    %26 = arith.truncf %25 : vector<16x32xf32> to vector<16x32xbf16>
    %c0_10 = arith.constant 0 : index
    %c0_11 = arith.constant 0 : index
    %27 = vector.load %arg3[%c0_10, %c0_11] : memref<32x96xbf16, #tpu.memory_space<vmem>>, vector<32x96xbf16>
    %cst_12 = arith.constant dense<0.000000e+00> : vector<16x96xf32>
    %28 = tpu.matmul %26, %27, %cst_12 {dimension_numbers = #tpu.dot_dimension_numbers<[1], [0], [0], [1], [0, 0, 1, 1], [], []>} : vector<16x32xbf16>, vector<32x96xbf16>, vector<16x96xf32> -> vector<16x96xf32>
    %c0_13 = arith.constant 0 : index
    %c0_14 = arith.constant 0 : index
    %29 = vector.load %arg4[%c0_13, %c0_14] : memref<1x96xf32, #tpu.memory_space<vmem>>, vector<1x96xf32>
    %30 = vector.broadcast %29 : vector<1x96xf32> to vector<16x96xf32>
    %31 = arith.addf %28, %30 : vector<16x96xf32>
    %32 = vector.extract_strided_slice %31 {offsets = [0, 0], sizes = [16, 32], strides = [1, 1]} : vector<16x96xf32> to vector<16x32xf32>
    %cst_15 = arith.constant 0.353553385 : f32
    %33 = vector.broadcast %cst_15 : f32 to vector<16x32xf32>
    %34 = arith.mulf %32, %33 : vector<16x32xf32>
    %35 = vector.shape_cast %34 : vector<16x32xf32> to vector<2x8x32xf32>
    %36 = vector.extract_strided_slice %31 {offsets = [0, 32], sizes = [16, 32], strides = [1, 1]} : vector<16x96xf32> to vector<16x32xf32>
    %37 = vector.shape_cast %36 : vector<16x32xf32> to vector<2x8x32xf32>
    %38 = vector.extract_strided_slice %31 {offsets = [0, 64], sizes = [16, 32], strides = [1, 1]} : vector<16x96xf32> to vector<16x32xf32>
    %39 = vector.shape_cast %38 : vector<16x32xf32> to vector<2x8x32xf32>
    %40 = vector.extract_strided_slice %35 {offsets = [0, 0, 0], sizes = [2, 8, 8], strides = [1, 1, 1]} : vector<2x8x32xf32> to vector<2x8x8xf32>
    %41 = vector.extract_strided_slice %37 {offsets = [0, 0, 0], sizes = [2, 8, 8], strides = [1, 1, 1]} : vector<2x8x32xf32> to vector<2x8x8xf32>
    %42 = vector.extract_strided_slice %39 {offsets = [0, 0, 0], sizes = [2, 8, 8], strides = [1, 1, 1]} : vector<2x8x32xf32> to vector<2x8x8xf32>
    "tpu.trace_start"() <{level = 10 : i32, message = "bqd,bkd->bqk"}> : () -> ()
    %cst_16 = arith.constant dense<0.000000e+00> : vector<2x8x8xf32>
    %43 = tpu.matmul %40, %41, %cst_16 {dimension_numbers = #tpu.dot_dimension_numbers<[2], [2], [1], [1], [0, 0, 0, 1, 1, 1], [0], [0]>} : vector<2x8x8xf32>, vector<2x8x8xf32>, vector<2x8x8xf32> -> vector<2x8x8xf32>
    "tpu.trace_stop"() : () -> ()
    %cst_17 = arith.constant dense<0xFF800000> : vector<2x8xf32>
    %44 = vector.multi_reduction <maximumf>, %43, %cst_17 [2] : vector<2x8x8xf32> to vector<2x8xf32>
    %45 = vector.shape_cast %44 : vector<2x8xf32> to vector<2x8x1xf32>
    %46 = vector.broadcast %45 : vector<2x8x1xf32> to vector<2x8x8xf32>
    %47 = arith.subf %43, %46 : vector<2x8x8xf32>
    %48 = math.exp %47 : vector<2x8x8xf32>
    %cst_18 = arith.constant dense<0.000000e+00> : vector<2x8xf32>
    %49 = vector.multi_reduction <add>, %48, %cst_18 [2] : vector<2x8x8xf32> to vector<2x8xf32>
    %50 = vector.shape_cast %49 : vector<2x8xf32> to vector<2x8x1xf32>
    %51 = tpu.reciprocal %50 {approx = true} : vector<2x8x1xf32> -> vector<2x8x1xf32>
    %52 = vector.broadcast %51 : vector<2x8x1xf32> to vector<2x8x8xf32>
    %53 = arith.mulf %48, %52 : vector<2x8x8xf32>
    "tpu.trace_start"() <{level = 10 : i32, message = "bqk,bkd->bqd"}> : () -> ()
    %cst_19 = arith.constant dense<0.000000e+00> : vector<2x8x8xf32>
    %54 = tpu.matmul %53, %42, %cst_19 {dimension_numbers = #tpu.dot_dimension_numbers<[2], [1], [1], [2], [0, 0, 0, 1, 1, 2], [0], [0]>} : vector<2x8x8xf32>, vector<2x8x8xf32>, vector<2x8x8xf32> -> vector<2x8x8xf32>
    "tpu.trace_stop"() : () -> ()
    %55 = vector.shape_cast %54 : vector<2x8x8xf32> to vector<16x8xf32>
    %56 = arith.truncf %55 : vector<16x8xf32> to vector<16x8xbf16>
    %c0_20 = arith.constant 0 : index
    %c0_21 = arith.constant 0 : index
    %c0_22 = arith.constant 0 : index
    %57 = vector.load %arg5[%c0_20, %c0_21, %c0_22] : memref<4x8x32xbf16, #tpu.memory_space<vmem>>, vector<1x8x32xbf16>
    %58 = vector.shape_cast %57 : vector<1x8x32xbf16> to vector<8x32xbf16>
    %cst_23 = arith.constant dense<0.000000e+00> : vector<16x32xf32>
    %59 = tpu.matmul %56, %58, %cst_23 {dimension_numbers = #tpu.dot_dimension_numbers<[1], [0], [0], [1], [0, 0, 1, 1], [], []>} : vector<16x8xbf16>, vector<8x32xbf16>, vector<16x32xf32> -> vector<16x32xf32>
    %60 = vector.extract_strided_slice %35 {offsets = [0, 0, 8], sizes = [2, 8, 8], strides = [1, 1, 1]} : vector<2x8x32xf32> to vector<2x8x8xf32>
    %61 = vector.extract_strided_slice %37 {offsets = [0, 0, 8], sizes = [2, 8, 8], strides = [1, 1, 1]} : vector<2x8x32xf32> to vector<2x8x8xf32>
    %62 = vector.extract_strided_slice %39 {offsets = [0, 0, 8], sizes = [2, 8, 8], strides = [1, 1, 1]} : vector<2x8x32xf32> to vector<2x8x8xf32>
    "tpu.trace_start"() <{level = 10 : i32, message = "bqd,bkd->bqk"}> : () -> ()
    %cst_24 = arith.constant dense<0.000000e+00> : vector<2x8x8xf32>
    %63 = tpu.matmul %60, %61, %cst_24 {dimension_numbers = #tpu.dot_dimension_numbers<[2], [2], [1], [1], [0, 0, 0, 1, 1, 1], [0], [0]>} : vector<2x8x8xf32>, vector<2x8x8xf32>, vector<2x8x8xf32> -> vector<2x8x8xf32>
    "tpu.trace_stop"() : () -> ()
    %cst_25 = arith.constant dense<0xFF800000> : vector<2x8xf32>
    %64 = vector.multi_reduction <maximumf>, %63, %cst_25 [2] : vector<2x8x8xf32> to vector<2x8xf32>
    %65 = vector.shape_cast %64 : vector<2x8xf32> to vector<2x8x1xf32>
    %66 = vector.broadcast %65 : vector<2x8x1xf32> to vector<2x8x8xf32>
    %67 = arith.subf %63, %66 : vector<2x8x8xf32>
    %68 = math.exp %67 : vector<2x8x8xf32>
    %cst_26 = arith.constant dense<0.000000e+00> : vector<2x8xf32>
    %69 = vector.multi_reduction <add>, %68, %cst_26 [2] : vector<2x8x8xf32> to vector<2x8xf32>
    %70 = vector.shape_cast %69 : vector<2x8xf32> to vector<2x8x1xf32>
    %71 = tpu.reciprocal %70 {approx = true} : vector<2x8x1xf32> -> vector<2x8x1xf32>
    %72 = vector.broadcast %71 : vector<2x8x1xf32> to vector<2x8x8xf32>
    %73 = arith.mulf %68, %72 : vector<2x8x8xf32>
    "tpu.trace_start"() <{level = 10 : i32, message = "bqk,bkd->bqd"}> : () -> ()
    %cst_27 = arith.constant dense<0.000000e+00> : vector<2x8x8xf32>
    %74 = tpu.matmul %73, %62, %cst_27 {dimension_numbers = #tpu.dot_dimension_numbers<[2], [1], [1], [2], [0, 0, 0, 1, 1, 2], [0], [0]>} : vector<2x8x8xf32>, vector<2x8x8xf32>, vector<2x8x8xf32> -> vector<2x8x8xf32>
    "tpu.trace_stop"() : () -> ()
    %75 = vector.shape_cast %74 : vector<2x8x8xf32> to vector<16x8xf32>
    %76 = arith.truncf %75 : vector<16x8xf32> to vector<16x8xbf16>
    %c1 = arith.constant 1 : index
    %c0_28 = arith.constant 0 : index
    %c0_29 = arith.constant 0 : index
    %77 = vector.load %arg5[%c1, %c0_28, %c0_29] : memref<4x8x32xbf16, #tpu.memory_space<vmem>>, vector<1x8x32xbf16>
    %78 = vector.shape_cast %77 : vector<1x8x32xbf16> to vector<8x32xbf16>
    %cst_30 = arith.constant dense<0.000000e+00> : vector<16x32xf32>
    %79 = tpu.matmul %76, %78, %cst_30 {dimension_numbers = #tpu.dot_dimension_numbers<[1], [0], [0], [1], [0, 0, 1, 1], [], []>} : vector<16x8xbf16>, vector<8x32xbf16>, vector<16x32xf32> -> vector<16x32xf32>
    %80 = arith.addf %59, %79 : vector<16x32xf32>
    %81 = vector.extract_strided_slice %35 {offsets = [0, 0, 16], sizes = [2, 8, 8], strides = [1, 1, 1]} : vector<2x8x32xf32> to vector<2x8x8xf32>
    %82 = vector.extract_strided_slice %37 {offsets = [0, 0, 16], sizes = [2, 8, 8], strides = [1, 1, 1]} : vector<2x8x32xf32> to vector<2x8x8xf32>
    %83 = vector.extract_strided_slice %39 {offsets = [0, 0, 16], sizes = [2, 8, 8], strides = [1, 1, 1]} : vector<2x8x32xf32> to vector<2x8x8xf32>
    "tpu.trace_start"() <{level = 10 : i32, message = "bqd,bkd->bqk"}> : () -> ()
    %cst_31 = arith.constant dense<0.000000e+00> : vector<2x8x8xf32>
    %84 = tpu.matmul %81, %82, %cst_31 {dimension_numbers = #tpu.dot_dimension_numbers<[2], [2], [1], [1], [0, 0, 0, 1, 1, 1], [0], [0]>} : vector<2x8x8xf32>, vector<2x8x8xf32>, vector<2x8x8xf32> -> vector<2x8x8xf32>
    "tpu.trace_stop"() : () -> ()
    %cst_32 = arith.constant dense<0xFF800000> : vector<2x8xf32>
    %85 = vector.multi_reduction <maximumf>, %84, %cst_32 [2] : vector<2x8x8xf32> to vector<2x8xf32>
    %86 = vector.shape_cast %85 : vector<2x8xf32> to vector<2x8x1xf32>
    %87 = vector.broadcast %86 : vector<2x8x1xf32> to vector<2x8x8xf32>
    %88 = arith.subf %84, %87 : vector<2x8x8xf32>
    %89 = math.exp %88 : vector<2x8x8xf32>
    %cst_33 = arith.constant dense<0.000000e+00> : vector<2x8xf32>
    %90 = vector.multi_reduction <add>, %89, %cst_33 [2] : vector<2x8x8xf32> to vector<2x8xf32>
    %91 = vector.shape_cast %90 : vector<2x8xf32> to vector<2x8x1xf32>
    %92 = tpu.reciprocal %91 {approx = true} : vector<2x8x1xf32> -> vector<2x8x1xf32>
    %93 = vector.broadcast %92 : vector<2x8x1xf32> to vector<2x8x8xf32>
    %94 = arith.mulf %89, %93 : vector<2x8x8xf32>
    "tpu.trace_start"() <{level = 10 : i32, message = "bqk,bkd->bqd"}> : () -> ()
    %cst_34 = arith.constant dense<0.000000e+00> : vector<2x8x8xf32>
    %95 = tpu.matmul %94, %83, %cst_34 {dimension_numbers = #tpu.dot_dimension_numbers<[2], [1], [1], [2], [0, 0, 0, 1, 1, 2], [0], [0]>} : vector<2x8x8xf32>, vector<2x8x8xf32>, vector<2x8x8xf32> -> vector<2x8x8xf32>
    "tpu.trace_stop"() : () -> ()
    %96 = vector.shape_cast %95 : vector<2x8x8xf32> to vector<16x8xf32>
    %97 = arith.truncf %96 : vector<16x8xf32> to vector<16x8xbf16>
    %c2 = arith.constant 2 : index
    %c0_35 = arith.constant 0 : index
    %c0_36 = arith.constant 0 : index
    %98 = vector.load %arg5[%c2, %c0_35, %c0_36] : memref<4x8x32xbf16, #tpu.memory_space<vmem>>, vector<1x8x32xbf16>
    %99 = vector.shape_cast %98 : vector<1x8x32xbf16> to vector<8x32xbf16>
    %cst_37 = arith.constant dense<0.000000e+00> : vector<16x32xf32>
    %100 = tpu.matmul %97, %99, %cst_37 {dimension_numbers = #tpu.dot_dimension_numbers<[1], [0], [0], [1], [0, 0, 1, 1], [], []>} : vector<16x8xbf16>, vector<8x32xbf16>, vector<16x32xf32> -> vector<16x32xf32>
    %101 = arith.addf %80, %100 : vector<16x32xf32>
    %102 = vector.extract_strided_slice %35 {offsets = [0, 0, 24], sizes = [2, 8, 8], strides = [1, 1, 1]} : vector<2x8x32xf32> to vector<2x8x8xf32>
    %103 = vector.extract_strided_slice %37 {offsets = [0, 0, 24], sizes = [2, 8, 8], strides = [1, 1, 1]} : vector<2x8x32xf32> to vector<2x8x8xf32>
    %104 = vector.extract_strided_slice %39 {offsets = [0, 0, 24], sizes = [2, 8, 8], strides = [1, 1, 1]} : vector<2x8x32xf32> to vector<2x8x8xf32>
    "tpu.trace_start"() <{level = 10 : i32, message = "bqd,bkd->bqk"}> : () -> ()
    %cst_38 = arith.constant dense<0.000000e+00> : vector<2x8x8xf32>
    %105 = tpu.matmul %102, %103, %cst_38 {dimension_numbers = #tpu.dot_dimension_numbers<[2], [2], [1], [1], [0, 0, 0, 1, 1, 1], [0], [0]>} : vector<2x8x8xf32>, vector<2x8x8xf32>, vector<2x8x8xf32> -> vector<2x8x8xf32>
    "tpu.trace_stop"() : () -> ()
    %cst_39 = arith.constant dense<0xFF800000> : vector<2x8xf32>
    %106 = vector.multi_reduction <maximumf>, %105, %cst_39 [2] : vector<2x8x8xf32> to vector<2x8xf32>
    %107 = vector.shape_cast %106 : vector<2x8xf32> to vector<2x8x1xf32>
    %108 = vector.broadcast %107 : vector<2x8x1xf32> to vector<2x8x8xf32>
    %109 = arith.subf %105, %108 : vector<2x8x8xf32>
    %110 = math.exp %109 : vector<2x8x8xf32>
    %cst_40 = arith.constant dense<0.000000e+00> : vector<2x8xf32>
    %111 = vector.multi_reduction <add>, %110, %cst_40 [2] : vector<2x8x8xf32> to vector<2x8xf32>
    %112 = vector.shape_cast %111 : vector<2x8xf32> to vector<2x8x1xf32>
    %113 = tpu.reciprocal %112 {approx = true} : vector<2x8x1xf32> -> vector<2x8x1xf32>
    %114 = vector.broadcast %113 : vector<2x8x1xf32> to vector<2x8x8xf32>
    %115 = arith.mulf %110, %114 : vector<2x8x8xf32>
    "tpu.trace_start"() <{level = 10 : i32, message = "bqk,bkd->bqd"}> : () -> ()
    %cst_41 = arith.constant dense<0.000000e+00> : vector<2x8x8xf32>
    %116 = tpu.matmul %115, %104, %cst_41 {dimension_numbers = #tpu.dot_dimension_numbers<[2], [1], [1], [2], [0, 0, 0, 1, 1, 2], [0], [0]>} : vector<2x8x8xf32>, vector<2x8x8xf32>, vector<2x8x8xf32> -> vector<2x8x8xf32>
    "tpu.trace_stop"() : () -> ()
    %117 = vector.shape_cast %116 : vector<2x8x8xf32> to vector<16x8xf32>
    %118 = arith.truncf %117 : vector<16x8xf32> to vector<16x8xbf16>
    %c3 = arith.constant 3 : index
    %c0_42 = arith.constant 0 : index
    %c0_43 = arith.constant 0 : index
    %119 = vector.load %arg5[%c3, %c0_42, %c0_43] : memref<4x8x32xbf16, #tpu.memory_space<vmem>>, vector<1x8x32xbf16>
    %120 = vector.shape_cast %119 : vector<1x8x32xbf16> to vector<8x32xbf16>
    %cst_44 = arith.constant dense<0.000000e+00> : vector<16x32xf32>
    %121 = tpu.matmul %118, %120, %cst_44 {dimension_numbers = #tpu.dot_dimension_numbers<[1], [0], [0], [1], [0, 0, 1, 1], [], []>} : vector<16x8xbf16>, vector<8x32xbf16>, vector<16x32xf32> -> vector<16x32xf32>
    %122 = arith.addf %101, %121 : vector<16x32xf32>
    %c0_45 = arith.constant 0 : index
    %c0_46 = arith.constant 0 : index
    %123 = vector.load %arg6[%c0_45, %c0_46] : memref<1x32xf32, #tpu.memory_space<vmem>>, vector<1x32xf32>
    %124 = vector.broadcast %123 : vector<1x32xf32> to vector<16x32xf32>
    %125 = arith.addf %122, %124 : vector<16x32xf32>
    %126 = arith.addf %125, %1 : vector<16x32xf32>
    %cst_47 = arith.constant dense<0.000000e+00> : vector<16xf32>
    %127 = vector.multi_reduction <add>, %126, %cst_47 [1] : vector<16x32xf32> to vector<16xf32>
    %128 = vector.shape_cast %127 : vector<16xf32> to vector<16x1xf32>
    %cst_48 = arith.constant 3.200000e+01 : f32
    %129 = vector.broadcast %cst_48 : f32 to vector<16x1xf32>
    %130 = arith.divf %128, %129 : vector<16x1xf32>
    %131 = vector.broadcast %130 : vector<16x1xf32> to vector<16x32xf32>
    %132 = arith.subf %126, %131 : vector<16x32xf32>
    %133 = arith.mulf %132, %132 : vector<16x32xf32>
    %cst_49 = arith.constant dense<0.000000e+00> : vector<16xf32>
    %134 = vector.multi_reduction <add>, %133, %cst_49 [1] : vector<16x32xf32> to vector<16xf32>
    %135 = vector.shape_cast %134 : vector<16xf32> to vector<16x1xf32>
    %cst_50 = arith.constant 3.200000e+01 : f32
    %136 = vector.broadcast %cst_50 : f32 to vector<16x1xf32>
    %137 = arith.divf %135, %136 : vector<16x1xf32>
    %138 = vector.broadcast %130 : vector<16x1xf32> to vector<16x32xf32>
    %139 = arith.subf %126, %138 : vector<16x32xf32>
    %cst_51 = arith.constant 9.99999974E-6 : f32
    %140 = vector.broadcast %cst_51 : f32 to vector<16x1xf32>
    %141 = arith.addf %137, %140 : vector<16x1xf32>
    %142 = math.rsqrt %141 : vector<16x1xf32>
    %143 = vector.broadcast %142 : vector<16x1xf32> to vector<16x32xf32>
    %144 = arith.mulf %139, %143 : vector<16x32xf32>
    %c0_52 = arith.constant 0 : index
    %c0_53 = arith.constant 0 : index
    %145 = vector.load %arg7[%c0_52, %c0_53] : memref<1x32xf32, #tpu.memory_space<vmem>>, vector<1x32xf32>
    %146 = vector.broadcast %145 : vector<1x32xf32> to vector<16x32xf32>
    %147 = arith.mulf %144, %146 : vector<16x32xf32>
    %c0_54 = arith.constant 0 : index
    %c0_55 = arith.constant 0 : index
    %148 = vector.load %arg8[%c0_54, %c0_55] : memref<1x32xf32, #tpu.memory_space<vmem>>, vector<1x32xf32>
    %149 = vector.broadcast %148 : vector<1x32xf32> to vector<16x32xf32>
    %150 = arith.addf %147, %149 : vector<16x32xf32>
    %151 = arith.truncf %150 : vector<16x32xf32> to vector<16x32xbf16>
    %c0_56 = arith.constant 0 : index
    %c0_57 = arith.constant 0 : index
    %152 = vector.load %arg9[%c0_56, %c0_57] : memref<32x128xbf16, #tpu.memory_space<vmem>>, vector<32x128xbf16>
    %cst_58 = arith.constant dense<0.000000e+00> : vector<16x128xf32>
    %153 = tpu.matmul %151, %152, %cst_58 {dimension_numbers = #tpu.dot_dimension_numbers<[1], [0], [0], [1], [0, 0, 1, 1], [], []>} : vector<16x32xbf16>, vector<32x128xbf16>, vector<16x128xf32> -> vector<16x128xf32>
    %c0_59 = arith.constant 0 : index
    %c0_60 = arith.constant 0 : index
    %154 = vector.load %arg10[%c0_59, %c0_60] : memref<1x128xf32, #tpu.memory_space<vmem>>, vector<1x128xf32>
    %155 = vector.broadcast %154 : vector<1x128xf32> to vector<16x128xf32>
    %156 = arith.addf %153, %155 : vector<16x128xf32>
    %cst_61 = arith.constant 5.000000e-01 : f32
    %157 = vector.broadcast %cst_61 : f32 to vector<16x128xf32>
    %158 = arith.mulf %157, %156 : vector<16x128xf32>
    %cst_62 = arith.constant 0.707106769 : f32
    %159 = vector.broadcast %cst_62 : f32 to vector<16x128xf32>
    %160 = arith.mulf %156, %159 : vector<16x128xf32>
    %161 = math.erf %160 : vector<16x128xf32>
    %cst_63 = arith.constant 1.000000e+00 : f32
    %162 = vector.broadcast %cst_63 : f32 to vector<16x128xf32>
    %163 = arith.addf %162, %161 : vector<16x128xf32>
    %164 = arith.mulf %158, %163 : vector<16x128xf32>
    %165 = arith.truncf %164 : vector<16x128xf32> to vector<16x128xbf16>
    %c0_64 = arith.constant 0 : index
    %c0_65 = arith.constant 0 : index
    %166 = vector.load %arg11[%c0_64, %c0_65] : memref<128x32xbf16, #tpu.memory_space<vmem>>, vector<128x32xbf16>
    %cst_66 = arith.constant dense<0.000000e+00> : vector<16x32xf32>
    %167 = tpu.matmul %165, %166, %cst_66 {dimension_numbers = #tpu.dot_dimension_numbers<[1], [0], [0], [1], [0, 0, 1, 1], [], []>} : vector<16x128xbf16>, vector<128x32xbf16>, vector<16x32xf32> -> vector<16x32xf32>
    %c0_67 = arith.constant 0 : index
    %c0_68 = arith.constant 0 : index
    %168 = vector.load %arg12[%c0_67, %c0_68] : memref<1x32xf32, #tpu.memory_space<vmem>>, vector<1x32xf32>
    %169 = vector.broadcast %168 : vector<1x32xf32> to vector<16x32xf32>
    %170 = arith.addf %167, %169 : vector<16x32xf32>
    %171 = arith.addf %170, %126 : vector<16x32xf32>
    %172 = vector.shape_cast %171 : vector<16x32xf32> to vector<2x8x32xf32>
    %c0_69 = arith.constant 0 : index
    %c0_70 = arith.constant 0 : index
    %c0_71 = arith.constant 0 : index
    %173 = vector.load %arg13[%c0_69, %c0_70, %c0_71] : memref<2x8x32xf32, #tpu.memory_space<vmem>>, vector<2x8x32xf32>
    tpu.vector_store %arg13[%c0_69, %c0_70, %c0_71], %172 {strides = array<i32>} : memref<2x8x32xf32, #tpu.memory_space<vmem>>, vector<2x8x32xf32>,
    return
  }
}

</mosaic_0001>

<llo_original>
// kernel: tpu_custom_call.1
$region0: #{tpu_custom_call.1}
  #allocation0 [shape = 'u32[]', space=smem, size = 0x4, offset = 0x4, fixed_abs, tag = 'smem constant byte address 0x4 - core index']
  #allocation1 [shape = 'u32[72,128]{1,0:T(1,128)}', space=vmem, size = 0x9000, scoped, tag = 'internal scratch']
  %s0 = inlined_call_operand.vmem [shape: f32[2,8,32], index: 0, kind: input, shape index: {}]
  %s1 = inlined_call_operand.vmem [shape: f32[1,32], index: 1, kind: input, shape index: {}]
  %s2 = inlined_call_operand.vmem [shape: f32[1,32], index: 2, kind: input, shape index: {}]
  %s3 = inlined_call_operand.vmem [shape: bf16[32,96], index: 3, kind: input, shape index: {}]
  %s4 = inlined_call_operand.vmem [shape: f32[1,96], index: 4, kind: input, shape index: {}]
  %s5 = inlined_call_operand.vmem [shape: bf16[4,8,32], index: 5, kind: input, shape index: {}]
  %s6 = inlined_call_operand.vmem [shape: f32[1,32], index: 6, kind: input, shape index: {}]
  %s7 = inlined_call_operand.vmem [shape: f32[1,32], index: 7, kind: input, shape index: {}]
  %s8 = inlined_call_operand.vmem [shape: f32[1,32], index: 8, kind: input, shape index: {}]
  %s9 = inlined_call_operand.vmem [shape: bf16[32,128], index: 9, kind: input, shape index: {}]
  %s10 = inlined_call_operand.vmem [shape: f32[1,128], index: 10, kind: input, shape index: {}]
  %s11 = inlined_call_operand.vmem [shape: bf16[128,32], index: 11, kind: input, shape index: {}]
  %s12 = inlined_call_operand.vmem [shape: f32[1,32], index: 12, kind: input, shape index: {}]
  %s13 = inlined_call_operand.hbm [shape: f32[2,8,32], index: 13, kind: output, shape index: {}]
  %s14 = sld [smem:[#allocation0]]
  $region62: #{tpu_custom_call.1} parent=0
    _
  %s16 = ssub.s32 1, %s14
  %s17 = scalar_select 0, %s16, %s14
  $region1: #{tpu_custom_call.1} parent=0
    #allocation2 [shape = 'u8[8192]{0}', space=vmem, size = 0x2000, scoped, tag = 'output window, operand 0, single buffered']
    #allocation3 [shape = 's32[1]{0}', space=sflag, size = 0x4, scoped, tag = 'scoped memory for tpu_custom_call.1']
    %18 = vsyncpa [#allocation3], 0
    // Predicated region
    $region2: #{tpu_custom_call.1} parent=1 // pred_check
      _
    $region3: #{tpu_custom_call.1} parent=1 // pred_check_branch
      %20 = sbr.rel (0) target = $region5
    $region4: #{tpu_custom_call.1} parent=1 // pred_region
      _
    $region5: #{tpu_custom_call.1} parent=1 // pred_fallthru
      _
    // Predicated region
    $region6: #{tpu_custom_call.1} parent=1 // pred_check
      _
    $region7: #{tpu_custom_call.1} parent=1 // pred_check_branch
      %22 = sbr.rel (0) target = $region9
    $region8: #{tpu_custom_call.1} parent=1 // pred_region
      _
    $region9: #{tpu_custom_call.1} parent=1 // pred_fallthru
      _
    // Predicated region
    $region10: #{tpu_custom_call.1} parent=1 // pred_check
      _
    $region11: #{tpu_custom_call.1} parent=1 // pred_check_branch
      %24 = sbr.rel (0) target = $region13
    $region12: #{tpu_custom_call.1} parent=1 // pred_region
      _
    $region13: #{tpu_custom_call.1} parent=1 // pred_fallthru
      _
    // Predicated region
    $region14: #{tpu_custom_call.1} parent=1 // pred_check
      _
    $region15: #{tpu_custom_call.1} parent=1 // pred_check_branch
      %26 = sbr.rel (0) target = $region17
    $region16: #{tpu_custom_call.1} parent=1 // pred_region
      _
    $region17: #{tpu_custom_call.1} parent=1 // pred_fallthru
      _
    // Predicated region
    $region18: #{tpu_custom_call.1} parent=1 // pred_check
      _
    $region19: #{tpu_custom_call.1} parent=1 // pred_check_branch
      %28 = sbr.rel (0) target = $region21
    $region20: #{tpu_custom_call.1} parent=1 // pred_region
      _
    $region21: #{tpu_custom_call.1} parent=1 // pred_fallthru
      _
    // Predicated region
    $region22: #{tpu_custom_call.1} parent=1 // pred_check
      _
    $region23: #{tpu_custom_call.1} parent=1 // pred_check_branch
      %30 = sbr.rel (0) target = $region25
    $region24: #{tpu_custom_call.1} parent=1 // pred_region
      _
    $region25: #{tpu_custom_call.1} parent=1 // pred_fallthru
      _
    // Predicated region
    $region26: #{tpu_custom_call.1} parent=1 // pred_check
      _
    $region27: #{tpu_custom_call.1} parent=1 // pred_check_branch
      %32 = sbr.rel (0) target = $region29
    $region28: #{tpu_custom_call.1} parent=1 // pred_region
      _
    $region29: #{tpu_custom_call.1} parent=1 // pred_fallthru
      _
    // Predicated region
    $region30: #{tpu_custom_call.1} parent=1 // pred_check
      _
    $region31: #{tpu_custom_call.1} parent=1 // pred_check_branch
      %34 = sbr.rel (0) target = $region33
    $region32: #{tpu_custom_call.1} parent=1 // pred_region
      _
    $region33: #{tpu_custom_call.1} parent=1 // pred_fallthru
      _
    // Predicated region
    $region34: #{tpu_custom_call.1} parent=1 // pred_check
      _
    $region35: #{tpu_custom_call.1} parent=1 // pred_check_branch
      %36 = sbr.rel (0) target = $region37
    $region36: #{tpu_custom_call.1} parent=1 // pred_region
      _
    $region37: #{tpu_custom_call.1} parent=1 // pred_fallthru
      _
    // Predicated region
    $region38: #{tpu_custom_call.1} parent=1 // pred_check
      _
    $region39: #{tpu_custom_call.1} parent=1 // pred_check_branch
      %38 = sbr.rel (0) target = $region41
    $region40: #{tpu_custom_call.1} parent=1 // pred_region
      _
    $region41: #{tpu_custom_call.1} parent=1 // pred_fallthru
      _
    // Predicated region
    $region42: #{tpu_custom_call.1} parent=1 // pred_check
      _
    $region43: #{tpu_custom_call.1} parent=1 // pred_check_branch
      %40 = sbr.rel (0) target = $region45
    $region44: #{tpu_custom_call.1} parent=1 // pred_region
      _
    $region45: #{tpu_custom_call.1} parent=1 // pred_fallthru
      _
    // Predicated region
    $region46: #{tpu_custom_call.1} parent=1 // pred_check
      _
    $region47: #{tpu_custom_call.1} parent=1 // pred_check_branch
      %42 = sbr.rel (0) target = $region49
    $region48: #{tpu_custom_call.1} parent=1 // pred_region
      _
    $region49: #{tpu_custom_call.1} parent=1 // pred_fallthru
      _
    // Predicated region
    $region50: #{tpu_custom_call.1} parent=1 // pred_check
      _
    $region51: #{tpu_custom_call.1} parent=1 // pred_check_branch
      %44 = sbr.rel (0) target = $region53
    $region52: #{tpu_custom_call.1} parent=1 // pred_region
      _
    $region53: #{tpu_custom_call.1} parent=1 // pred_fallthru
      _
    %v46 = vld [vmem:[%s0] sm:$0xff]
    %v47 = vld [vmem:[%s0 + $0x8] sm:$0xff]
    %vm48 = vcmask 261120
    %v49 = vsel %vm48, %v46, 0.0
    %50 = vadd.xlane.f32.xlu0 %v49
    %v51 = vpop.xlane.xlu0 %50
    %v52 = vsel %vm48, %v47, 0.0
    %53 = vadd.xlane.f32.xlu0 %v52
    %v54 = vpop.xlane.xlu0 %53
    %v55 = vrcp.pop 32.0
    %v56 = vmul.f32 32.0, %v55
    %v57 = vsub.f32 1.0, %v56
    %v58 = vmul.f32 %v55, %v57
    %v59 = vadd.f32 %v55, %v58
    %vm60 = vweird.f32 %v55
    %v61 = vsel %vm60, %v55, %v59
    %v62 = vmul.f32 %v51, %v61
    %v63 = vmul.f32 %v54, %v61
    %v64 = vsub.f32 %v46, %v62
    %v65 = vsub.f32 %v47, %v63
    %v66 = vmul.f32 %v64, %v64
    %v67 = vmul.f32 %v65, %v65
    %v68 = vsel %vm48, %v66, 0.0
    %69 = vadd.xlane.f32.xlu0 %v68
    %v70 = vpop.xlane.xlu0 %69
    %v71 = vsel %vm48, %v67, 0.0
    %72 = vadd.xlane.f32.xlu0 %v71
    %v73 = vpop.xlane.xlu0 %72
    %v74 = vmul.f32 %v70, %v61
    %v75 = vmul.f32 %v73, %v61
    %v76 = vadd.f32 %v74, 1e-05
    %v77 = vadd.f32 %v75, 1e-05
    %v78 = vrsqrt.pop %v76
    %v79 = vmul.f32 %v78, %v76
    %v80 = vmul.f32 %v79, %v78
    %v81 = vmul.f32 0.5, %v80
    %v82 = vsub.f32 1.5, %v81
    %v83 = vmul.f32 %v78, %v82
    %vm84 = vweird.f32 %v76
    %vm85 = vweird.f32 %v78
    %vm86 = vmor %vm84, %vm85
    %v87 = vsel %vm86, %v78, %v83
    %v88 = vrsqrt.pop %v77
    %v89 = vmul.f32 %v88, %v77
    %v90 = vmul.f32 %v89, %v88
    %v91 = vmul.f32 0.5, %v90
    %v92 = vsub.f32 1.5, %v91
    %v93 = vmul.f32 %v88, %v92
    %vm94 = vweird.f32 %v77
    %vm95 = vweird.f32 %v88
    %vm96 = vmor %vm94, %vm95
    %v97 = vsel %vm96, %v88, %v93
    %v98 = vmul.f32 %v64, %v87
    %v99 = vmul.f32 %v65, %v97
    %v100 = vld [vmem:[%s1] sm:$0x1]
    %v102 = vperm.slane %v100, 0
    %v104 = vmul.f32 %v98, %v102
    %v105 = vmul.f32 %v99, %v102
    %v106 = vld [vmem:[%s2] sm:$0x1]
    %v108 = vperm.slane %v106, 0
    %v110 = vadd.f32 %v104, %v108
    %v111 = vadd.f32 %v105, %v108
    %v112 = vpack.c.bf16 %v111, %v110
    %v113 = vld [vmem:[%s3] sm:$0xf]
    %v114 = vld [vmem:[%s3 + $0x4] sm:$0xf]
    %v115 = vld [vmem:[%s3 + $0x8] sm:$0xf]
    %v116 = vld [vmem:[%s3 + $0xc] sm:$0xf]
    %v117 = vld [vmem:[%s4] sm:$0x1]
    %v119 = vperm.slane %v117, 0
    %v125 = vunpack.c.l.b16 %v113
    %v126 = vunpack.c.l.b16 %v114
    %v127 = vunpack.c.l.b16 %v115
    %v128 = vunpack.c.l.b16 %v116
    %v129 = vpack.c.b16 %v126, %v125
    %v130 = vpack.c.b16 %v128, %v127
    %v134 = vsel %vm48, %v112, 0
    %136 = vmatpush.bf16.msra.mxu0 0
    %137 = vmatpush.bf16.msra.mxu0 0
    %138 = vmatpush.bf16.msra.mxu0 0
    %139 = vmatpush.bf16.msra.mxu0 0
    %140 = vmatpush.bf16.msra.mxu0 0
    %141 = vmatpush.bf16.msra.mxu0 0
    %142 = vmatpush.bf16.msra.mxu0 %v130
    %143 = vmatpush.bf16.msra.mxu0 %v129
    %144 = vmatmul.bf16.gmra.mxu0 %v134
    %v145 = vpop.f32.mrf.mxu0
    %v146 = vadd.f32 %v119, %v145
    %v147 = vpop.f32.mrf.mxu0
    %v148 = vadd.f32 %v119, %v147
    %149 = vdwg.mxu0
    %v150 = vmul.f32 %v146, 0.35355338
    %v151 = vmul.f32 %v148, 0.35355338
    %153 = vrot.lane.b32.xlu0 %v146, 96
    %v154 = vpop.permute.xlu0 %153
    %vm155 = vcmask 64512
    %v157 = vsel %vm155, %v150, 0
    %v159 = vsel %vm155, %v154, 0
    %161 = vmatpush.xpose.msra.mxu0 0.0
    %162 = vmatpush.xpose.msra.mxu0 0.0
    %163 = vmatpush.xpose.msra.mxu0 0.0
    %164 = vmatpush.xpose.msra.mxu0 0.0
    %165 = vmatpush.xpose.msra.mxu0 0.0
    %166 = vmatpush.xpose.msra.mxu0 0.0
    %167 = vmatpush.xpose.msra.mxu0 0.0
    %168 = vmatpush.xpose.msra.mxu0 0.0
    %169 = vmatpush.xpose.msra.mxu0 0.0
    %170 = vmatpush.xpose.msra.mxu0 0.0
    %171 = vmatpush.xpose.msra.mxu0 0.0
    %172 = vmatpush.xpose.msra.mxu0 0.0
    %173 = vmatpush.xpose.msra.mxu0 0.0
    %174 = vmatpush.xpose.msra.mxu0 0.0
    %175 = vmatpush.xpose.msra.mxu0 0.0
    %176 = vmatpush.xpose.msra.mxu0 %v159
    %177 = vmatmul.f32.gmra.mxu0 %v157
    %v178 = vpop.f32.mrf.mxu0
    %v179 = vadd.f32 0.0, %v178
    %180 = vdwg.mxu0
    %182 = vrot.lane.b32.xlu0 %v148, 96
    %v183 = vpop.permute.xlu0 %182
    %v185 = vsel %vm155, %v151, 0
    %v187 = vsel %vm155, %v183, 0
    %189 = vmatpush.xpose.msra.mxu0 0.0
    %190 = vmatpush.xpose.msra.mxu0 0.0
    %191 = vmatpush.xpose.msra.mxu0 0.0
    %192 = vmatpush.xpose.msra.mxu0 0.0
    %193 = vmatpush.xpose.msra.mxu0 0.0
    %194 = vmatpush.xpose.msra.mxu0 0.0
    %195 = vmatpush.xpose.msra.mxu0 0.0
    %196 = vmatpush.xpose.msra.mxu0 0.0
    %197 = vmatpush.xpose.msra.mxu0 0.0
    %198 = vmatpush.xpose.msra.mxu0 0.0
    %199 = vmatpush.xpose.msra.mxu0 0.0
    %200 = vmatpush.xpose.msra.mxu0 0.0
    %201 = vmatpush.xpose.msra.mxu0 0.0
    %202 = vmatpush.xpose.msra.mxu0 0.0
    %203 = vmatpush.xpose.msra.mxu0 0.0
    %204 = vmatpush.xpose.msra.mxu0 %v187
    %205 = vmatmul.f32.gmra.mxu0 %v185
    %v206 = vpop.f32.mrf.mxu0
    %v207 = vadd.f32 0.0, %v206
    %208 = vdwg.mxu0
    %v209 = vsel %vm155, %v179, -inf
    %210 = vmax.xlane.f32.xlu0 %v209
    %v211 = vpop.xlane.xlu0 %210
    %v212 = vsel %vm155, %v207, -inf
    %213 = vmax.xlane.f32.xlu0 %v212
    %v214 = vpop.xlane.xlu0 %213
    %v215 = vsub.f32 %v179, %v211
    %v216 = vsub.f32 %v207, %v214
    %v217 = vmul.f32 %v215, 1.442695
    %v218 = vpow.pop %v217
    %v219 = vmul.f32 %v216, 1.442695
    %v220 = vpow.pop %v219
    %v221 = vsel %vm155, %v218, 0.0
    %222 = vadd.xlane.f32.xlu0 %v221
    %v223 = vpop.xlane.xlu0 %222
    %v224 = vsel %vm155, %v220, 0.0
    %225 = vadd.xlane.f32.xlu0 %v224
    %v226 = vpop.xlane.xlu0 %225
    %v227 = vrcp.pop %v223
    %v228 = vrcp.pop %v226
    %v229 = vmul.f32 %v218, %v227
    %v230 = vmul.f32 %v220, %v228
    %231 = vrot.lane.b32.xlu0 %v146, 64
    %v232 = vpop.permute.xlu0 %231
    %v235 = vsel %vm155, %v229, 0
    %237 = vmatpush.msra.mxu0 0.0
    %238 = vmatpush.msra.mxu0 0.0
    %239 = vmatpush.msra.mxu0 0.0
    %240 = vmatpush.msra.mxu0 0.0
    %241 = vmatpush.msra.mxu0 0.0
    %242 = vmatpush.msra.mxu0 0.0
    %243 = vmatpush.msra.mxu0 0.0
    %244 = vmatpush.msra.mxu0 0.0
    %245 = vmatpush.msra.mxu0 0.0
    %246 = vmatpush.msra.mxu0 0.0
    %247 = vmatpush.msra.mxu0 0.0
    %248 = vmatpush.msra.mxu0 0.0
    %249 = vmatpush.msra.mxu0 0.0
    %250 = vmatpush.msra.mxu0 0.0
    %251 = vmatpush.msra.mxu0 0.0
    %252 = vmatpush.msra.mxu0 %v232
    %253 = vmatmul.f32.gmra.mxu0 %v235
    %v254 = vpop.f32.mrf.mxu0
    %v255 = vadd.f32 0.0, %v254
    %256 = vdwg.mxu0
    %257 = vrot.lane.b32.xlu0 %v148, 64
    %v258 = vpop.permute.xlu0 %257
    %v261 = vsel %vm155, %v230, 0
    %263 = vmatpush.msra.mxu0 0.0
    %264 = vmatpush.msra.mxu0 0.0
    %265 = vmatpush.msra.mxu0 0.0
    %266 = vmatpush.msra.mxu0 0.0
    %267 = vmatpush.msra.mxu0 0.0
    %268 = vmatpush.msra.mxu0 0.0
    %269 = vmatpush.msra.mxu0 0.0
    %270 = vmatpush.msra.mxu0 0.0
    %271 = vmatpush.msra.mxu0 0.0
    %272 = vmatpush.msra.mxu0 0.0
    %273 = vmatpush.msra.mxu0 0.0
    %274 = vmatpush.msra.mxu0 0.0
    %275 = vmatpush.msra.mxu0 0.0
    %276 = vmatpush.msra.mxu0 0.0
    %277 = vmatpush.msra.mxu0 0.0
    %278 = vmatpush.msra.mxu0 %v258
    %279 = vmatmul.f32.gmra.mxu0 %v261
    %v280 = vpop.f32.mrf.mxu0
    %v281 = vadd.f32 0.0, %v280
    %282 = vdwg.mxu0
    %v283 = vpack.c.bf16 %v281, %v255
    %v284 = vld [vmem:[%s5] sm:$0xf]
    %285 = vrot.lane.b32.xlu0 %v150, 120
    %v286 = vpop.permute.xlu0 %285
    %287 = vrot.lane.b32.xlu0 %v146, 88
    %v288 = vpop.permute.xlu0 %287
    %v289 = vsel %vm155, %v286, 0
    %v291 = vsel %vm155, %v288, 0
    %293 = vmatpush.xpose.msra.mxu0 0.0
    %294 = vmatpush.xpose.msra.mxu0 0.0
    %295 = vmatpush.xpose.msra.mxu0 0.0
    %296 = vmatpush.xpose.msra.mxu0 0.0
    %297 = vmatpush.xpose.msra.mxu0 0.0
    %298 = vmatpush.xpose.msra.mxu0 0.0
    %299 = vmatpush.xpose.msra.mxu0 0.0
    %300 = vmatpush.xpose.msra.mxu0 0.0
    %301 = vmatpush.xpose.msra.mxu0 0.0
    %302 = vmatpush.xpose.msra.mxu0 0.0
    %303 = vmatpush.xpose.msra.mxu0 0.0
    %304 = vmatpush.xpose.msra.mxu0 0.0
    %305 = vmatpush.xpose.msra.mxu0 0.0
    %306 = vmatpush.xpose.msra.mxu0 0.0
    %307 = vmatpush.xpose.msra.mxu0 0.0
    %308 = vmatpush.xpose.msra.mxu0 %v291
    %309 = vmatmul.f32.gmra.mxu0 %v289
    %v310 = vpop.f32.mrf.mxu0
    %v311 = vadd.f32 0.0, %v310
    %312 = vdwg.mxu0
    %313 = vrot.lane.b32.xlu0 %v151, 120
    %v314 = vpop.permute.xlu0 %313
    %315 = vrot.lane.b32.xlu0 %v148, 88
    %v316 = vpop.permute.xlu0 %315
    %v317 = vsel %vm155, %v314, 0
    %v319 = vsel %vm155, %v316, 0
    %321 = vmatpush.xpose.msra.mxu0 0.0
    %322 = vmatpush.xpose.msra.mxu0 0.0
    %323 = vmatpush.xpose.msra.mxu0 0.0
    %324 = vmatpush.xpose.msra.mxu0 0.0
    %325 = vmatpush.xpose.msra.mxu0 0.0
    %326 = vmatpush.xpose.msra.mxu0 0.0
    %327 = vmatpush.xpose.msra.mxu0 0.0
    %328 = vmatpush.xpose.msra.mxu0 0.0
    %329 = vmatpush.xpose.msra.mxu0 0.0
    %330 = vmatpush.xpose.msra.mxu0 0.0
    %331 = vmatpush.xpose.msra.mxu0 0.0
    %332 = vmatpush.xpose.msra.mxu0 0.0
    %333 = vmatpush.xpose.msra.mxu0 0.0
    %334 = vmatpush.xpose.msra.mxu0 0.0
    %335 = vmatpush.xpose.msra.mxu0 0.0
    %336 = vmatpush.xpose.msra.mxu0 %v319
    %337 = vmatmul.f32.gmra.mxu0 %v317
    %v338 = vpop.f32.mrf.mxu0
    %v339 = vadd.f32 0.0, %v338
    %340 = vdwg.mxu0
    %v341 = vsel %vm155, %v311, -inf
    %342 = vmax.xlane.f32.xlu0 %v341
    %v343 = vpop.xlane.xlu0 %342
    %v344 = vsel %vm155, %v339, -inf
    %345 = vmax.xlane.f32.xlu0 %v344
    %v346 = vpop.xlane.xlu0 %345
    %v347 = vsub.f32 %v311, %v343
    %v348 = vsub.f32 %v339, %v346
    %v349 = vmul.f32 %v347, 1.442695
    %v350 = vpow.pop %v349
    %v351 = vmul.f32 %v348, 1.442695
    %v352 = vpow.pop %v351
    %v353 = vsel %vm155, %v350, 0.0
    %354 = vadd.xlane.f32.xlu0 %v353
    %v355 = vpop.xlane.xlu0 %354
    %v356 = vsel %vm155, %v352, 0.0
    %357 = vadd.xlane.f32.xlu0 %v356
    %v358 = vpop.xlane.xlu0 %357
    %v359 = vrcp.pop %v355
    %v360 = vrcp.pop %v358
    %v361 = vmul.f32 %v350, %v359
    %v362 = vmul.f32 %v352, %v360
    %363 = vrot.lane.b32.xlu0 %v146, 56
    %v364 = vpop.permute.xlu0 %363
    %v367 = vsel %vm155, %v361, 0
    %369 = vmatpush.msra.mxu0 0.0
    %370 = vmatpush.msra.mxu0 0.0
    %371 = vmatpush.msra.mxu0 0.0
    %372 = vmatpush.msra.mxu0 0.0
    %373 = vmatpush.msra.mxu0 0.0
    %374 = vmatpush.msra.mxu0 0.0
    %375 = vmatpush.msra.mxu0 0.0
    %376 = vmatpush.msra.mxu0 0.0
    %377 = vmatpush.msra.mxu0 0.0
    %378 = vmatpush.msra.mxu0 0.0
    %379 = vmatpush.msra.mxu0 0.0
    %380 = vmatpush.msra.mxu0 0.0
    %381 = vmatpush.msra.mxu0 0.0
    %382 = vmatpush.msra.mxu0 0.0
    %383 = vmatpush.msra.mxu0 0.0
    %384 = vmatpush.msra.mxu0 %v364
    %385 = vmatmul.f32.gmra.mxu0 %v367
    %v386 = vpop.f32.mrf.mxu0
    %v387 = vadd.f32 0.0, %v386
    %388 = vdwg.mxu0
    %389 = vrot.lane.b32.xlu0 %v148, 56
    %v390 = vpop.permute.xlu0 %389
    %v393 = vsel %vm155, %v362, 0
    %395 = vmatpush.msra.mxu0 0.0
    %396 = vmatpush.msra.mxu0 0.0
    %397 = vmatpush.msra.mxu0 0.0
    %398 = vmatpush.msra.mxu0 0.0
    %399 = vmatpush.msra.mxu0 0.0
    %400 = vmatpush.msra.mxu0 0.0
    %401 = vmatpush.msra.mxu0 0.0
    %402 = vmatpush.msra.mxu0 0.0
    %403 = vmatpush.msra.mxu0 0.0
    %404 = vmatpush.msra.mxu0 0.0
    %405 = vmatpush.msra.mxu0 0.0
    %406 = vmatpush.msra.mxu0 0.0
    %407 = vmatpush.msra.mxu0 0.0
    %408 = vmatpush.msra.mxu0 0.0
    %409 = vmatpush.msra.mxu0 0.0
    %410 = vmatpush.msra.mxu0 %v390
    %411 = vmatmul.f32.gmra.mxu0 %v393
    %v412 = vpop.f32.mrf.mxu0
    %v413 = vadd.f32 0.0, %v412
    %414 = vdwg.mxu0
    %v415 = vpack.c.bf16 %v413, %v387
    %s416 = scalar_lea.vmem %s5, 4
    %v417 = vld [vmem:[%s416] sm:$0xf]
    %v419 = vsel %vm155, %v415, 0
    %vm421 = vcmask 1043456
    %v423 = vsel %vm421, %v417, 0
    %425 = vmatpush.bf16.msra.mxu0 0
    %426 = vmatpush.bf16.msra.mxu0 0
    %427 = vmatpush.bf16.msra.mxu0 0
    %428 = vmatpush.bf16.msra.mxu0 0
    %429 = vmatpush.bf16.msra.mxu0 0
    %430 = vmatpush.bf16.msra.mxu0 0
    %431 = vmatpush.bf16.msra.mxu0 0
    %432 = vmatpush.bf16.msra.mxu0 %v423
    %433 = vmatmul.bf16.gmra.mxu0 %v419
    %v434 = vpop.f32.mrf.mxu0
    %v435 = vadd.f32 0.0, %v434
    %v436 = vpop.f32.mrf.mxu0
    %v437 = vadd.f32 0.0, %v436
    %438 = vdwg.mxu0
    %v440 = vsel %vm155, %v283, 0
    %v443 = vsel %vm421, %v284, 0
    %445 = vmatpush.bf16.msra.mxu0 0
    %446 = vmatpush.bf16.msra.mxu0 0
    %447 = vmatpush.bf16.msra.mxu0 0
    %448 = vmatpush.bf16.msra.mxu0 0
    %449 = vmatpush.bf16.msra.mxu0 0
    %450 = vmatpush.bf16.msra.mxu0 0
    %451 = vmatpush.bf16.msra.mxu0 0
    %452 = vmatpush.bf16.msra.mxu0 %v443
    %453 = vmatmul.bf16.gmra.mxu0 %v440
    %v454 = vpop.f32.mrf.mxu0
    %v455 = vadd.f32 %v435, %v454
    %v456 = vpop.f32.mrf.mxu0
    %v457 = vadd.f32 %v437, %v456
    %458 = vdwg.mxu0
    %459 = vrot.lane.b32.xlu0 %v150, 112
    %v460 = vpop.permute.xlu0 %459
    %461 = vrot.lane.b32.xlu0 %v146, 80
    %v462 = vpop.permute.xlu0 %461
    %v463 = vsel %vm155, %v460, 0
    %v465 = vsel %vm155, %v462, 0
    %467 = vmatpush.xpose.msra.mxu0 0.0
    %468 = vmatpush.xpose.msra.mxu0 0.0
    %469 = vmatpush.xpose.msra.mxu0 0.0
    %470 = vmatpush.xpose.msra.mxu0 0.0
    %471 = vmatpush.xpose.msra.mxu0 0.0
    %472 = vmatpush.xpose.msra.mxu0 0.0
    %473 = vmatpush.xpose.msra.mxu0 0.0
    %474 = vmatpush.xpose.msra.mxu0 0.0
    %475 = vmatpush.xpose.msra.mxu0 0.0
    %476 = vmatpush.xpose.msra.mxu0 0.0
    %477 = vmatpush.xpose.msra.mxu0 0.0
    %478 = vmatpush.xpose.msra.mxu0 0.0
    %479 = vmatpush.xpose.msra.mxu0 0.0
    %480 = vmatpush.xpose.msra.mxu0 0.0
    %481 = vmatpush.xpose.msra.mxu0 0.0
    %482 = vmatpush.xpose.msra.mxu0 %v465
    %483 = vmatmul.f32.gmra.mxu0 %v463
    %v484 = vpop.f32.mrf.mxu0
    %v485 = vadd.f32 0.0, %v484
    %486 = vdwg.mxu0
    %487 = vrot.lane.b32.xlu0 %v151, 112
    %v488 = vpop.permute.xlu0 %487
    %489 = vrot.lane.b32.xlu0 %v148, 80
    %v490 = vpop.permute.xlu0 %489
    %v491 = vsel %vm155, %v488, 0
    %v493 = vsel %vm155, %v490, 0
    %495 = vmatpush.xpose.msra.mxu0 0.0
    %496 = vmatpush.xpose.msra.mxu0 0.0
    %497 = vmatpush.xpose.msra.mxu0 0.0
    %498 = vmatpush.xpose.msra.mxu0 0.0
    %499 = vmatpush.xpose.msra.mxu0 0.0
    %500 = vmatpush.xpose.msra.mxu0 0.0
    %501 = vmatpush.xpose.msra.mxu0 0.0
    %502 = vmatpush.xpose.msra.mxu0 0.0
    %503 = vmatpush.xpose.msra.mxu0 0.0
    %504 = vmatpush.xpose.msra.mxu0 0.0
    %505 = vmatpush.xpose.msra.mxu0 0.0
    %506 = vmatpush.xpose.msra.mxu0 0.0
    %507 = vmatpush.xpose.msra.mxu0 0.0
    %508 = vmatpush.xpose.msra.mxu0 0.0
    %509 = vmatpush.xpose.msra.mxu0 0.0
    %510 = vmatpush.xpose.msra.mxu0 %v493
    %511 = vmatmul.f32.gmra.mxu0 %v491
    %v512 = vpop.f32.mrf.mxu0
    %v513 = vadd.f32 0.0, %v512
    %514 = vdwg.mxu0
    %v515 = vsel %vm155, %v485, -inf
    %516 = vmax.xlane.f32.xlu0 %v515
    %v517 = vpop.xlane.xlu0 %516
    %v518 = vsel %vm155, %v513, -inf
    %519 = vmax.xlane.f32.xlu0 %v518
    %v520 = vpop.xlane.xlu0 %519
    %v521 = vsub.f32 %v485, %v517
    %v522 = vsub.f32 %v513, %v520
    %v523 = vmul.f32 %v521, 1.442695
    %v524 = vpow.pop %v523
    %v525 = vmul.f32 %v522, 1.442695
    %v526 = vpow.pop %v525
    %v527 = vsel %vm155, %v524, 0.0
    %528 = vadd.xlane.f32.xlu0 %v527
    %v529 = vpop.xlane.xlu0 %528
    %v530 = vsel %vm155, %v526, 0.0
    %531 = vadd.xlane.f32.xlu0 %v530
    %v532 = vpop.xlane.xlu0 %531
    %v533 = vrcp.pop %v529
    %v534 = vrcp.pop %v532
    %v535 = vmul.f32 %v524, %v533
    %v536 = vmul.f32 %v526, %v534
    %537 = vrot.lane.b32.xlu0 %v146, 48
    %v538 = vpop.permute.xlu0 %537
    %v541 = vsel %vm155, %v535, 0
    %543 = vmatpush.msra.mxu0 0.0
    %544 = vmatpush.msra.mxu0 0.0
    %545 = vmatpush.msra.mxu0 0.0
    %546 = vmatpush.msra.mxu0 0.0
    %547 = vmatpush.msra.mxu0 0.0
    %548 = vmatpush.msra.mxu0 0.0
    %549 = vmatpush.msra.mxu0 0.0
    %550 = vmatpush.msra.mxu0 0.0
    %551 = vmatpush.msra.mxu0 0.0
    %552 = vmatpush.msra.mxu0 0.0
    %553 = vmatpush.msra.mxu0 0.0
    %554 = vmatpush.msra.mxu0 0.0
    %555 = vmatpush.msra.mxu0 0.0
    %556 = vmatpush.msra.mxu0 0.0
    %557 = vmatpush.msra.mxu0 0.0
    %558 = vmatpush.msra.mxu0 %v538
    %559 = vmatmul.f32.gmra.mxu0 %v541
    %v560 = vpop.f32.mrf.mxu0
    %v561 = vadd.f32 0.0, %v560
    %562 = vdwg.mxu0
    %563 = vrot.lane.b32.xlu0 %v148, 48
    %v564 = vpop.permute.xlu0 %563
    %v567 = vsel %vm155, %v536, 0
    %569 = vmatpush.msra.mxu0 0.0
    %570 = vmatpush.msra.mxu0 0.0
    %571 = vmatpush.msra.mxu0 0.0
    %572 = vmatpush.msra.mxu0 0.0
    %573 = vmatpush.msra.mxu0 0.0
    %574 = vmatpush.msra.mxu0 0.0
    %575 = vmatpush.msra.mxu0 0.0
    %576 = vmatpush.msra.mxu0 0.0
    %577 = vmatpush.msra.mxu0 0.0
    %578 = vmatpush.msra.mxu0 0.0
    %579 = vmatpush.msra.mxu0 0.0
    %580 = vmatpush.msra.mxu0 0.0
    %581 = vmatpush.msra.mxu0 0.0
    %582 = vmatpush.msra.mxu0 0.0
    %583 = vmatpush.msra.mxu0 0.0
    %584 = vmatpush.msra.mxu0 %v564
    %585 = vmatmul.f32.gmra.mxu0 %v567
    %v586 = vpop.f32.mrf.mxu0
    %v587 = vadd.f32 0.0, %v586
    %588 = vdwg.mxu0
    %v589 = vpack.c.bf16 %v587, %v561
    %s590 = scalar_lea.vmem %s5, 8
    %v591 = vld [vmem:[%s590] sm:$0xf]
    %v593 = vsel %vm155, %v589, 0
    %v596 = vsel %vm421, %v591, 0
    %598 = vmatpush.bf16.msra.mxu0 0
    %599 = vmatpush.bf16.msra.mxu0 0
    %600 = vmatpush.bf16.msra.mxu0 0
    %601 = vmatpush.bf16.msra.mxu0 0
    %602 = vmatpush.bf16.msra.mxu0 0
    %603 = vmatpush.bf16.msra.mxu0 0
    %604 = vmatpush.bf16.msra.mxu0 0
    %605 = vmatpush.bf16.msra.mxu0 %v596
    %606 = vmatmul.bf16.gmra.mxu0 %v593
    %v607 = vpop.f32.mrf.mxu0
    %v608 = vadd.f32 0.0, %v607
    %v609 = vpop.f32.mrf.mxu0
    %v610 = vadd.f32 0.0, %v609
    %611 = vdwg.mxu0
    %v612 = vadd.f32 %v455, %v608
    %v613 = vadd.f32 %v457, %v610
    %614 = vrot.lane.b32.xlu0 %v150, 104
    %v615 = vpop.permute.xlu0 %614
    %616 = vrot.lane.b32.xlu0 %v146, 72
    %v617 = vpop.permute.xlu0 %616
    %v618 = vsel %vm155, %v615, 0
    %v620 = vsel %vm155, %v617, 0
    %622 = vmatpush.xpose.msra.mxu0 0.0
    %623 = vmatpush.xpose.msra.mxu0 0.0
    %624 = vmatpush.xpose.msra.mxu0 0.0
    %625 = vmatpush.xpose.msra.mxu0 0.0
    %626 = vmatpush.xpose.msra.mxu0 0.0
    %627 = vmatpush.xpose.msra.mxu0 0.0
    %628 = vmatpush.xpose.msra.mxu0 0.0
    %629 = vmatpush.xpose.msra.mxu0 0.0
    %630 = vmatpush.xpose.msra.mxu0 0.0
    %631 = vmatpush.xpose.msra.mxu0 0.0
    %632 = vmatpush.xpose.msra.mxu0 0.0
    %633 = vmatpush.xpose.msra.mxu0 0.0
    %634 = vmatpush.xpose.msra.mxu0 0.0
    %635 = vmatpush.xpose.msra.mxu0 0.0
    %636 = vmatpush.xpose.msra.mxu0 0.0
    %637 = vmatpush.xpose.msra.mxu0 %v620
    %638 = vmatmul.f32.gmra.mxu0 %v618
    %v639 = vpop.f32.mrf.mxu0
    %v640 = vadd.f32 0.0, %v639
    %641 = vdwg.mxu0
    %642 = vrot.lane.b32.xlu0 %v151, 104
    %v643 = vpop.permute.xlu0 %642
    %644 = vrot.lane.b32.xlu0 %v148, 72
    %v645 = vpop.permute.xlu0 %644
    %v646 = vsel %vm155, %v643, 0
    %v648 = vsel %vm155, %v645, 0
    %650 = vmatpush.xpose.msra.mxu0 0.0
    %651 = vmatpush.xpose.msra.mxu0 0.0
    %652 = vmatpush.xpose.msra.mxu0 0.0
    %653 = vmatpush.xpose.msra.mxu0 0.0
    %654 = vmatpush.xpose.msra.mxu0 0.0
    %655 = vmatpush.xpose.msra.mxu0 0.0
    %656 = vmatpush.xpose.msra.mxu0 0.0
    %657 = vmatpush.xpose.msra.mxu0 0.0
    %658 = vmatpush.xpose.msra.mxu0 0.0
    %659 = vmatpush.xpose.msra.mxu0 0.0
    %660 = vmatpush.xpose.msra.mxu0 0.0
    %661 = vmatpush.xpose.msra.mxu0 0.0
    %662 = vmatpush.xpose.msra.mxu0 0.0
    %663 = vmatpush.xpose.msra.mxu0 0.0
    %664 = vmatpush.xpose.msra.mxu0 0.0
    %665 = vmatpush.xpose.msra.mxu0 %v648
    %666 = vmatmul.f32.gmra.mxu0 %v646
    %v667 = vpop.f32.mrf.mxu0
    %v668 = vadd.f32 0.0, %v667
    %669 = vdwg.mxu0
    %v670 = vsel %vm155, %v640, -inf
    %671 = vmax.xlane.f32.xlu0 %v670
    %v672 = vpop.xlane.xlu0 %671
    %v673 = vsel %vm155, %v668, -inf
    %674 = vmax.xlane.f32.xlu0 %v673
    %v675 = vpop.xlane.xlu0 %674
    %v676 = vsub.f32 %v640, %v672
    %v677 = vsub.f32 %v668, %v675
    %v678 = vmul.f32 %v676, 1.442695
    %v679 = vpow.pop %v678
    %v680 = vmul.f32 %v677, 1.442695
    %v681 = vpow.pop %v680
    %v682 = vsel %vm155, %v679, 0.0
    %683 = vadd.xlane.f32.xlu0 %v682
    %v684 = vpop.xlane.xlu0 %683
    %v685 = vsel %vm155, %v681, 0.0
    %686 = vadd.xlane.f32.xlu0 %v685
    %v687 = vpop.xlane.xlu0 %686
    %v688 = vrcp.pop %v684
    %v689 = vrcp.pop %v687
    %v690 = vmul.f32 %v679, %v688
    %v691 = vmul.f32 %v681, %v689
    %692 = vrot.lane.b32.xlu0 %v146, 40
    %v693 = vpop.permute.xlu0 %692
    %v696 = vsel %vm155, %v690, 0
    %698 = vmatpush.msra.mxu0 0.0
    %699 = vmatpush.msra.mxu0 0.0
    %700 = vmatpush.msra.mxu0 0.0
    %701 = vmatpush.msra.mxu0 0.0
    %702 = vmatpush.msra.mxu0 0.0
    %703 = vmatpush.msra.mxu0 0.0
    %704 = vmatpush.msra.mxu0 0.0
    %705 = vmatpush.msra.mxu0 0.0
    %706 = vmatpush.msra.mxu0 0.0
    %707 = vmatpush.msra.mxu0 0.0
    %708 = vmatpush.msra.mxu0 0.0
    %709 = vmatpush.msra.mxu0 0.0
    %710 = vmatpush.msra.mxu0 0.0
    %711 = vmatpush.msra.mxu0 0.0
    %712 = vmatpush.msra.mxu0 0.0
    %713 = vmatpush.msra.mxu0 %v693
    %714 = vmatmul.f32.gmra.mxu0 %v696
    %v715 = vpop.f32.mrf.mxu0
    %v716 = vadd.f32 0.0, %v715
    %717 = vdwg.mxu0
    %718 = vrot.lane.b32.xlu0 %v148, 40
    %v719 = vpop.permute.xlu0 %718
    %v722 = vsel %vm155, %v691, 0
    %724 = vmatpush.msra.mxu0 0.0
    %725 = vmatpush.msra.mxu0 0.0
    %726 = vmatpush.msra.mxu0 0.0
    %727 = vmatpush.msra.mxu0 0.0
    %728 = vmatpush.msra.mxu0 0.0
    %729 = vmatpush.msra.mxu0 0.0
    %730 = vmatpush.msra.mxu0 0.0
    %731 = vmatpush.msra.mxu0 0.0
    %732 = vmatpush.msra.mxu0 0.0
    %733 = vmatpush.msra.mxu0 0.0
    %734 = vmatpush.msra.mxu0 0.0
    %735 = vmatpush.msra.mxu0 0.0
    %736 = vmatpush.msra.mxu0 0.0
    %737 = vmatpush.msra.mxu0 0.0
    %738 = vmatpush.msra.mxu0 0.0
    %739 = vmatpush.msra.mxu0 %v719
    %740 = vmatmul.f32.gmra.mxu0 %v722
    %v741 = vpop.f32.mrf.mxu0
    %v742 = vadd.f32 0.0, %v741
    %743 = vdwg.mxu0
    %v744 = vpack.c.bf16 %v742, %v716
    %s745 = scalar_lea.vmem %s5, 12
    %v746 = vld [vmem:[%s745] sm:$0xf]
    %v748 = vsel %vm155, %v744, 0
    %v751 = vsel %vm421, %v746, 0
    %753 = vmatpush.bf16.msra.mxu0 0
    %754 = vmatpush.bf16.msra.mxu0 0
    %755 = vmatpush.bf16.msra.mxu0 0
    %756 = vmatpush.bf16.msra.mxu0 0
    %757 = vmatpush.bf16.msra.mxu0 0
    %758 = vmatpush.bf16.msra.mxu0 0
    %759 = vmatpush.bf16.msra.mxu0 0
    %760 = vmatpush.bf16.msra.mxu0 %v751
    %761 = vmatmul.bf16.gmra.mxu0 %v748
    %v762 = vpop.f32.mrf.mxu0
    %v763 = vadd.f32 0.0, %v762
    %v764 = vpop.f32.mrf.mxu0
    %v765 = vadd.f32 0.0, %v764
    %766 = vdwg.mxu0
    %v767 = vadd.f32 %v612, %v763
    %v768 = vadd.f32 %v613, %v765
    %v769 = vld [vmem:[%s6] sm:$0x1]
    %v771 = vperm.slane %v769, 0
    %v773 = vadd.f32 %v767, %v771
    %v774 = vadd.f32 %v768, %v771
    %v775 = vadd.f32 %v773, %v46
    %v776 = vadd.f32 %v774, %v47
    %v777 = vsel %vm48, %v775, 0.0
    %778 = vadd.xlane.f32.xlu0 %v777
    %v779 = vpop.xlane.xlu0 %778
    %v780 = vsel %vm48, %v776, 0.0
    %781 = vadd.xlane.f32.xlu0 %v780
    %v782 = vpop.xlane.xlu0 %781
    %v783 = vmul.f32 %v779, %v61
    %v784 = vmul.f32 %v782, %v61
    %v785 = vsub.f32 %v775, %v783
    %v786 = vsub.f32 %v776, %v784
    %v787 = vmul.f32 %v785, %v785
    %v788 = vmul.f32 %v786, %v786
    %v789 = vsel %vm48, %v787, 0.0
    %790 = vadd.xlane.f32.xlu0 %v789
    %v791 = vpop.xlane.xlu0 %790
    %v792 = vsel %vm48, %v788, 0.0
    %793 = vadd.xlane.f32.xlu0 %v792
    %v794 = vpop.xlane.xlu0 %793
    %v795 = vmul.f32 %v791, %v61
    %v796 = vmul.f32 %v794, %v61
    %v797 = vadd.f32 %v795, 1e-05
    %v798 = vadd.f32 %v796, 1e-05
    %v799 = vrsqrt.pop %v797
    %v800 = vmul.f32 %v799, %v797
    %v801 = vmul.f32 %v800, %v799
    %v802 = vmul.f32 0.5, %v801
    %v803 = vsub.f32 1.5, %v802
    %v804 = vmul.f32 %v799, %v803
    %vm805 = vweird.f32 %v797
    %vm806 = vweird.f32 %v799
    %vm807 = vmor %vm805, %vm806
    %v808 = vsel %vm807, %v799, %v804
    %v809 = vrsqrt.pop %v798
    %v810 = vmul.f32 %v809, %v798
    %v811 = vmul.f32 %v810, %v809
    %v812 = vmul.f32 0.5, %v811
    %v813 = vsub.f32 1.5, %v812
    %v814 = vmul.f32 %v809, %v813
    %vm815 = vweird.f32 %v798
    %vm816 = vweird.f32 %v809
    %vm817 = vmor %vm815, %vm816
    %v818 = vsel %vm817, %v809, %v814
    %v819 = vmul.f32 %v785, %v808
    %v820 = vmul.f32 %v786, %v818
    %v821 = vld [vmem:[%s7] sm:$0x1]
    %v823 = vperm.slane %v821, 0
    %v825 = vmul.f32 %v819, %v823
    %v826 = vmul.f32 %v820, %v823
    %v827 = vld [vmem:[%s8] sm:$0x1]
    %v829 = vperm.slane %v827, 0
    %v831 = vadd.f32 %v825, %v829
    %v832 = vadd.f32 %v826, %v829
    %v833 = vpack.c.bf16 %v832, %v831
    %v834 = vld [vmem:[%s9] sm:$0xf]
    %v835 = vld [vmem:[%s9 + $0x4] sm:$0xf]
    %v836 = vld [vmem:[%s9 + $0x8] sm:$0xf]
    %v837 = vld [vmem:[%s9 + $0xc] sm:$0xf]
    %v838 = vld [vmem:[%s10] sm:$0x1]
    %v840 = vperm.slane %v838, 0
    %v846 = vunpack.c.l.b16 %v834
    %v847 = vunpack.c.l.b16 %v835
    %v848 = vunpack.c.l.b16 %v836
    %v849 = vunpack.c.l.b16 %v837
    %v850 = vpack.c.b16 %v847, %v846
    %v851 = vpack.c.b16 %v849, %v848
    %v855 = vsel %vm48, %v833, 0
    %857 = vmatpush.bf16.msra.mxu0 0
    %858 = vmatpush.bf16.msra.mxu0 0
    %859 = vmatpush.bf16.msra.mxu0 0
    %860 = vmatpush.bf16.msra.mxu0 0
    %861 = vmatpush.bf16.msra.mxu0 0
    %862 = vmatpush.bf16.msra.mxu0 0
    %863 = vmatpush.bf16.msra.mxu0 %v851
    %864 = vmatpush.bf16.msra.mxu0 %v850
    %865 = vmatmul.bf16.gmra.mxu0 %v855
    %v866 = vpop.f32.mrf.mxu0
    %v867 = vadd.f32 %v840, %v866
    %v868 = vpop.f32.mrf.mxu0
    %v869 = vadd.f32 %v840, %v868
    %870 = vdwg.mxu0
    %v871 = vmul.f32 %v867, 0.5
    %v872 = vmul.f32 %v869, 0.5
    %v873 = vmul.f32 %v867, 0.70710677
    %v874 = vmul.f32 %v869, 0.70710677
    %v875 = vmul.f32 %v873, %v873
    %v876 = vmin.f32 16.0, %v875
    %v877 = vmul.f32 %v876, 2.1237322e-06
    %v878 = vadd.f32 %v877, 0.00028619796
    %v879 = vmul.f32 %v876, %v878
    %v880 = vadd.f32 %v879, 0.0036580483
    %v881 = vmul.f32 %v876, %v880
    %v882 = vadd.f32 %v881, 0.05243302
    %v883 = vmul.f32 %v876, %v882
    %v884 = vadd.f32 %v883, 0.18741608
    %v885 = vmul.f32 %v876, %v884
    %v886 = vadd.f32 %v885, 1.1283791
    %v887 = vmul.f32 %v873, %v886
    %v888 = vmul.f32 %v876, 3.8918573e-05
    %v889 = vadd.f32 %v888, 0.001143296
    %v890 = vmul.f32 %v876, %v889
    %v891 = vadd.f32 %v890, 0.014752088
    %v892 = vmul.f32 %v876, %v891
    %v893 = vadd.f32 %v892, 0.112945676
    %v894 = vmul.f32 %v876, %v893
    %v895 = vadd.f32 %v894, 0.4994258
    %v896 = vmul.f32 %v876, %v895
    %v897 = vadd.f32 %v896, 1.0
    %v898 = vrcp.pop %v897
    %v899 = vmul.f32 %v897, %v898
    %v900 = vsub.f32 1.0, %v899
    %v901 = vmul.f32 %v898, %v900
    %v902 = vadd.f32 %v898, %v901
    %vm903 = vweird.f32 %v897
    %vm904 = vweird.f32 %v898
    %vm905 = vmor %vm903, %vm904
    %v906 = vsel %vm905, %v898, %v902
    %v907 = vand.u32 2147483647, %v897
    %vm908 = vcmp.eq.f32.partialorder %v907, 8.507059e+37
    %v909 = vand.u32 %v897, 2147483648
    %v910 = vor.u32 1.1754944e-38, %v909
    %v911 = vsel %vm908, %v910, %v906
    %v912 = vmul.f32 %v887, %v911
    %v913 = vmin.f32 %v912, 1.0
    %v914 = vmax.f32 %v913, -1.0
    %v915 = vmul.f32 %v874, %v874
    %v916 = vmin.f32 16.0, %v915
    %v917 = vmul.f32 %v916, 2.1237322e-06
    %v918 = vadd.f32 %v917, 0.00028619796
    %v919 = vmul.f32 %v916, %v918
    %v920 = vadd.f32 %v919, 0.0036580483
    %v921 = vmul.f32 %v916, %v920
    %v922 = vadd.f32 %v921, 0.05243302
    %v923 = vmul.f32 %v916, %v922
    %v924 = vadd.f32 %v923, 0.18741608
    %v925 = vmul.f32 %v916, %v924
    %v926 = vadd.f32 %v925, 1.1283791
    %v927 = vmul.f32 %v874, %v926
    %v928 = vmul.f32 %v916, 3.8918573e-05
    %v929 = vadd.f32 %v928, 0.001143296
    %v930 = vmul.f32 %v916, %v929
    %v931 = vadd.f32 %v930, 0.014752088
    %v932 = vmul.f32 %v916, %v931
    %v933 = vadd.f32 %v932, 0.112945676
    %v934 = vmul.f32 %v916, %v933
    %v935 = vadd.f32 %v934, 0.4994258
    %v936 = vmul.f32 %v916, %v935
    %v937 = vadd.f32 %v936, 1.0
    %v938 = vrcp.pop %v937
    %v939 = vmul.f32 %v937, %v938
    %v940 = vsub.f32 1.0, %v939
    %v941 = vmul.f32 %v938, %v940
    %v942 = vadd.f32 %v938, %v941
    %vm943 = vweird.f32 %v937
    %vm944 = vweird.f32 %v938
    %vm945 = vmor %vm943, %vm944
    %v946 = vsel %vm945, %v938, %v942
    %v947 = vand.u32 2147483647, %v937
    %vm948 = vcmp.eq.f32.partialorder %v947, 8.507059e+37
    %v949 = vand.u32 %v937, 2147483648
    %v950 = vor.u32 1.1754944e-38, %v949
    %v951 = vsel %vm948, %v950, %v946
    %v952 = vmul.f32 %v927, %v951
    %v953 = vmin.f32 %v952, 1.0
    %v954 = vmax.f32 %v953, -1.0
    %v955 = vadd.f32 %v914, 1.0
    %v956 = vadd.f32 %v954, 1.0
    %v957 = vmul.f32 %v871, %v955
    %v958 = vmul.f32 %v872, %v956
    %v959 = vpack.c.bf16 %v958, %v957
    %v960 = vld [vmem:[%s11] sm:$0xf]
    %v961 = vld [vmem:[%s11 + $0x4] sm:$0xf]
    %v962 = vld [vmem:[%s11 + $0x8] sm:$0xf]
    %v963 = vld [vmem:[%s11 + $0xc] sm:$0xf]
    %v964 = vld [vmem:[%s11 + $0x10] sm:$0xf]
    %v965 = vld [vmem:[%s11 + $0x14] sm:$0xf]
    %v966 = vld [vmem:[%s11 + $0x18] sm:$0xf]
    %v967 = vld [vmem:[%s11 + $0x1c] sm:$0xf]
    %v968 = vld [vmem:[%s11 + $0x20] sm:$0xf]
    %v969 = vld [vmem:[%s11 + $0x24] sm:$0xf]
    %v970 = vld [vmem:[%s11 + $0x28] sm:$0xf]
    %v971 = vld [vmem:[%s11 + $0x2c] sm:$0xf]
    %v972 = vld [vmem:[%s11 + $0x30] sm:$0xf]
    %v973 = vld [vmem:[%s11 + $0x34] sm:$0xf]
    %v974 = vld [vmem:[%s11 + $0x38] sm:$0xf]
    %v975 = vld [vmem:[%s11 + $0x3c] sm:$0xf]
    %v976 = vld [vmem:[%s12] sm:$0x1]
    %v978 = vperm.slane %v976, 0
    %v996 = vunpack.c.l.b16 %v960
    %v997 = vunpack.c.l.b16 %v961
    %v998 = vunpack.c.l.b16 %v962
    %v999 = vunpack.c.l.b16 %v963
    %v1000 = vunpack.c.l.b16 %v964
    %v1001 = vunpack.c.l.b16 %v965
    %v1002 = vunpack.c.l.b16 %v966
    %v1003 = vunpack.c.l.b16 %v967
    %v1004 = vunpack.c.l.b16 %v968
    %v1005 = vunpack.c.l.b16 %v969
    %v1006 = vunpack.c.l.b16 %v970
    %v1007 = vunpack.c.l.b16 %v971
    %v1008 = vunpack.c.l.b16 %v972
    %v1009 = vunpack.c.l.b16 %v973
    %v1010 = vunpack.c.l.b16 %v974
    %v1011 = vunpack.c.l.b16 %v975
    %v1012 = vpack.c.b16 %v997, %v996
    %v1013 = vpack.c.b16 %v999, %v998
    %v1014 = vpack.c.b16 %v1001, %v1000
    %v1015 = vpack.c.b16 %v1003, %v1002
    %v1016 = vpack.c.b16 %v1005, %v1004
    %v1017 = vpack.c.b16 %v1007, %v1006
    %v1018 = vpack.c.b16 %v1009, %v1008
    %v1019 = vpack.c.b16 %v1011, %v1010
    %1028 = vmatpush.bf16.msra.mxu0 %v1019
    %1029 = vmatpush.bf16.msra.mxu0 %v1018
    %1030 = vmatpush.bf16.msra.mxu0 %v1017
    %1031 = vmatpush.bf16.msra.mxu0 %v1016
    %1032 = vmatpush.bf16.msra.mxu0 %v1015
    %1033 = vmatpush.bf16.msra.mxu0 %v1014
    %1034 = vmatpush.bf16.msra.mxu0 %v1013
    %1035 = vmatpush.bf16.msra.mxu0 %v1012
    %1036 = vmatmul.bf16.gmra.mxu0 %v959
    %v1037 = vpop.f32.mrf.mxu0
    %v1038 = vadd.f32 %v978, %v1037
    %v1039 = vpop.f32.mrf.mxu0
    %v1040 = vadd.f32 %v978, %v1039
    %1041 = vdwg.mxu0
    %v1042 = vadd.f32 %v1038, %v775
    %v1043 = vadd.f32 %v1040, %v776
    %1044 = vst.msk [vmem:[#allocation2] sm:$0xff] %vm48, %v1042
    %1045 = vst.msk [vmem:[#allocation2 + $0x8] sm:$0xff] %vm48, %v1043
    // Predicated region
    $region54: #{tpu_custom_call.1} parent=1 // pred_check
      _
    $region55: #{tpu_custom_call.1} parent=1 // pred_check_branch
      %1047 = sbr.rel (0) target = $region57
    $region56: #{tpu_custom_call.1} parent=1 // pred_region
      %1049 = vsyncadd [#allocation3], 0
      %s1050 = sshll.u32 [#allocation2], 4
      %s1051 = int_to_ptr.vmem [resolvable:$true] %s1050
      %s1052 = sshll.u32 %s13, 4
      %s1053 = int_to_ptr.hbm [resolvable:$true] %s1052
      %1058 = dma.vmem_to_hbm [thread:$0]  %s1051, 256, %s1053, [#allocation3], 128, 128, 8
    $region57: #{tpu_custom_call.1} parent=1 // pred_fallthru
      _
    // Predicated region
    $region58: #{tpu_custom_call.1} parent=1 // pred_check
      _
    $region59: #{tpu_custom_call.1} parent=1 // pred_check_branch
      %1060 = sbr.rel (0) target = $region61
    $region60: #{tpu_custom_call.1} parent=1 // pred_region
      %1062 = dma.done [#allocation3], 256
    $region61: #{tpu_custom_call.1} parent=1 // pred_fallthru
      _
    %1063 = vsyncpa [#allocation3], 1

</llo_original>
